<compile_context>
chip_gen: v7x
topology: tpu7x:2x2x1
jax: 0.10.0
libtpu: 0.0.40
codegen_flags: <defaults>
</compile_context>

<pallas_src>
import jax
import jax.numpy as jnp
from jax import lax
from jax.experimental import pallas as pl
from jax.experimental.pallas import tpu as pltpu


# --------------------------------------------------------------------------
# Phase 1: streaming global average pool + 1x1 conv + folded BN + ReLU
# --------------------------------------------------------------------------
def _make_reduce_kernel(hw, tile_hw):
    inv_hw = 1.0 / float(hw)
    needs_mask = (hw % tile_hw) != 0

    def kernel(x_ref, w_ref, scale_ref, bias_ref, y_ref, acc_ref):
        # x_ref:     (1, C_in, TILE_HW)  native dtype
        # w_ref:     (C_out, C_in)       f32 (1x1 conv weight, squeezed)
        # scale_ref: (C_out, 1)          f32 (folded BN scale)
        # bias_ref:  (C_out, 1)          f32 (folded BN bias)
        # y_ref:     (1, C_out, 1)       f32 output (pooled+conv+bn+relu column)
        # acc_ref:   (C_in, TILE_HW)     f32 scratch accumulator
        k = pl.program_id(1)

        @pl.when(k == 0)
        def _():
            acc_ref[...] = jnp.zeros_like(acc_ref)

        xb = x_ref[0].astype(jnp.float32)                # (C_in, TILE_HW)
        if needs_mask:
            lane = lax.broadcasted_iota(jnp.int32, xb.shape, 1)
            valid = (k * tile_hw + lane) < hw
            xb = jnp.where(valid, xb, 0.0)
        # Lane-wide elementwise accumulation (VPU slot, free under DMA).
        acc_ref[...] += xb

        @pl.when(k == pl.num_programs(1) - 1)
        def _():
            # Cross-lane collapse + mean only once per image.
            pooled = jnp.sum(acc_ref[...], axis=-1, keepdims=True) * inv_hw  # (C_in, 1)
            # 1x1 conv == tiny matmul; keep pooled as a column so no transposes.
            y = jnp.dot(w_ref[...], pooled,
                        preferred_element_type=jnp.float32)                 # (C_out, 1)
            y = y * scale_ref[...] + bias_ref[...]                          # folded BN
            y = jnp.maximum(y, 0.0)                                          # ReLU
            y_ref[...] = y[None].astype(y_ref.dtype)                        # (1, C_out, 1)

    return kernel


# --------------------------------------------------------------------------
# Phase 2: broadcast (== bilinear upsample of a 1x1 map) over HW, lane-dense
# --------------------------------------------------------------------------
def _broadcast_kernel(y_ref, o_ref):
    # y_ref: (1, C_out, 1); o_ref: (1, C_out, TILE_OUT)
    o_ref[...] = jnp.broadcast_to(y_ref[...], o_ref.shape).astype(o_ref.dtype)


def aspp_pooling(x_nchw, conv_w, bn_gamma, bn_beta, bn_mean, bn_var,
                 eps=1e-5, reduce_tile=512, bcast_tile=1024):
    """x_nchw: (N, C_in, H, W); conv_w: (C_out, C_in, 1, 1) -> (N, C_out, H, W)."""
    N, C_in, H, W = x_nchw.shape
    C_out = conv_w.shape[0]
    HW = H * W
    out_dtype = x_nchw.dtype

    # Keep the input in its native dtype (don't inflate HBM read traffic).
    x_flat = x_nchw.reshape(N, C_in, HW)
    w = conv_w.reshape(C_out, C_in).astype(jnp.float32)

    # Fold BatchNorm (inference) into per-channel scale/bias columns.
    scale = (bn_gamma.astype(jnp.float32)
             / jnp.sqrt(bn_var.astype(jnp.float32) + eps))
    bias = bn_beta.astype(jnp.float32) - bn_mean.astype(jnp.float32) * scale
    scale = scale.reshape(C_out, 1)
    bias = bias.reshape(C_out, 1)

    # ---------------- Phase 1: tiled streaming reduction -------------------
    t_in = HW if HW <= reduce_tile else reduce_tile   # full extent or mult. of 128
    n_k = pl.cdiv(HW, t_in)
    in_itemsize = jnp.dtype(x_flat.dtype).itemsize

    y = pl.pallas_call(
        _make_reduce_kernel(HW, t_in),
        out_shape=jax.ShapeDtypeStruct((N, C_out, 1), jnp.float32),
        grid_spec=pltpu.PrefetchScalarGridSpec(
            num_scalar_prefetch=0,
            grid=(N, n_k),
            in_specs=[
                pl.BlockSpec((1, C_in, t_in), lambda n, k: (n, 0, k)),
                pl.BlockSpec((C_out, C_in), lambda n, k: (0, 0)),
                pl.BlockSpec((C_out, 1), lambda n, k: (0, 0)),
                pl.BlockSpec((C_out, 1), lambda n, k: (0, 0)),
            ],
            out_specs=pl.BlockSpec((1, C_out, 1), lambda n, k: (n, 0, 0)),
            scratch_shapes=[pltpu.VMEM((C_in, t_in), jnp.float32)],
        ),
        compiler_params=pltpu.CompilerParams(
            dimension_semantics=("parallel", "arbitrary")),
        cost_estimate=pl.CostEstimate(
            flops=N * C_in * HW + 2 * N * C_in * C_out,
            transcendentals=0,
            bytes_accessed=(N * C_in * HW * in_itemsize
                            + C_out * C_in * 4 + 2 * C_out * 4 + N * C_out * 4),
        ),
    )(x_flat, w, scale, bias)

    # ---------------- Phase 2: lane-dense broadcast write -------------------
    t_out = HW if HW <= bcast_tile else bcast_tile    # full extent or mult. of 128
    n_t = pl.cdiv(HW, t_out)
    out_itemsize = jnp.dtype(out_dtype).itemsize

    out_flat = pl.pallas_call(
        _broadcast_kernel,
        out_shape=jax.ShapeDtypeStruct((N, C_out, HW), out_dtype),
        grid_spec=pltpu.PrefetchScalarGridSpec(
            num_scalar_prefetch=0,
            grid=(N, n_t),
            in_specs=[pl.BlockSpec((1, C_out, 1), lambda n, t: (n, 0, 0))],
            out_specs=pl.BlockSpec((1, C_out, t_out), lambda n, t: (n, 0, t)),
        ),
        compiler_params=pltpu.CompilerParams(
            dimension_semantics=("parallel", "parallel")),
        cost_estimate=pl.CostEstimate(
            flops=0,
            transcendentals=0,
            bytes_accessed=N * C_out * (4 + HW * out_itemsize),
        ),
    )(y)

    return out_flat.reshape(N, C_out, H, W)


# --------------------------------------------------------------------------
# Pure-JAX reference (same math as the PyTorch module in eval mode).
# --------------------------------------------------------------------------
def _reference(x, conv_w, bn_gamma, bn_beta, bn_mean, bn_var, eps=1e-5):
    N, C_in, H, W = x.shape
    C_out = conv_w.shape[0]
    pooled = x.astype(jnp.float32).mean(axis=(2, 3))            # (N, C_in)
    y = pooled @ conv_w.reshape(C_out, C_in).astype(jnp.float32).T
    scale = bn_gamma / jnp.sqrt(bn_var + eps)
    y = y * scale + (bn_beta - bn_mean * scale)
    y = jnp.maximum(y, 0.0)
    return jnp.broadcast_to(y[:, :, None, None], (N, C_out, H, W)).astype(x.dtype)


if __name__ == "__main__":
    key = jax.random.PRNGKey(0)
    k_x, k_w, k_g, k_b, k_m, k_v, k_x2 = jax.random.split(key, 7)

    N, C_in, C_out, H, W = 2, 4, 8, 16, 16

    x = jax.random.normal(k_x, (N, C_in, H, W), dtype=jnp.float32)
    conv_w = jax.random.normal(k_w, (C_out, C_in, 1, 1), dtype=jnp.float32) * 0.1
    bn_gamma = 1.0 + 0.1 * jax.random.normal(k_g, (C_out,), dtype=jnp.float32)
    bn_beta = 0.1 * jax.random.normal(k_b, (C_out,), dtype=jnp.float32)
    bn_mean = 0.1 * jax.random.normal(k_m, (C_out,), dtype=jnp.float32)
    bn_var = jnp.abs(1.0 + 0.1 * jax.random.normal(k_v, (C_out,), dtype=jnp.float32))

    # Main check (HW fits in one tile).
    out = aspp_pooling(x, conv_w, bn_gamma, bn_beta, bn_mean, bn_var)
    jax.block_until_ready(out)
    ref = _reference(x, conv_w, bn_gamma, bn_beta, bn_mean, bn_var)
    assert out.shape == (N, C_out, H, W)
    assert jnp.allclose(out, ref, atol=1e-5, rtol=1e-5)

    # Second check exercising the tiled/masked path (HW not a tile multiple).
    H2 = W2 = 20  # HW = 400, reduce tile 128 -> 4 tiles, last one masked
    x2 = jax.random.normal(k_x2, (N, C_in, H2, W2), dtype=jnp.float32)
    out2 = aspp_pooling(x2, conv_w, bn_gamma, bn_beta, bn_mean, bn_var,
                        reduce_tile=128, bcast_tile=128)
    jax.block_until_ready(out2)
    ref2 = _reference(x2, conv_w, bn_gamma, bn_beta, bn_mean, bn_var)
    assert out2.shape == (N, C_out, H2, W2)
    assert jnp.allclose(out2, ref2, atol=1e-5, rtol=1e-5)

    print("KERNEL_OK")
</pallas_src>

<mosaic_0001>
module attributes {stable_mosaic.version = 11 : i64} {
  func.func @kernel(%arg0: i32, %arg1: i32, %arg2: memref<1x4x256xf32, #tpu.memory_space<vmem>>, %arg3: memref<8x4xf32, #tpu.memory_space<vmem>>, %arg4: memref<8x1xf32, #tpu.memory_space<vmem>>, %arg5: memref<8x1xf32, #tpu.memory_space<vmem>>, %arg6: memref<1x8x1xf32, #tpu.memory_space<vmem>>, %arg7: memref<4x256xf32, #tpu.memory_space<vmem>>) attributes {dimension_semantics = [#tpu.dimension_semantics<parallel>, #tpu.dimension_semantics<arbitrary>], iteration_bounds = array<i64: 2, 1>, scalar_prefetch = 0 : i64, scratch_operands = 1 : i64, tpu.core_type = #tpu.core_type<tc>, window_params = [{transform_indices = @transform_0, window_bounds = array<i64: 1, 4, 256>}, {pipeline_mode = #tpu.pipeline_mode<synchronous>, transform_indices = @transform_1, window_bounds = array<i64: 8, 4>}, {pipeline_mode = #tpu.pipeline_mode<synchronous>, transform_indices = @transform_2, window_bounds = array<i64: 8, 1>}, {pipeline_mode = #tpu.pipeline_mode<synchronous>, transform_indices = @transform_3, window_bounds = array<i64: 8, 1>}, {transform_indices = @transform_4, window_bounds = array<i64: 1, 8, 1>}]} {
    %c0_i32 = arith.constant 0 : i32
    %0 = arith.cmpi eq, %arg1, %c0_i32 : i32
    %1 = arith.extui %0 : i1 to i32
    %c0_i32_0 = arith.constant 0 : i32
    %2 = arith.cmpi ne, %1, %c0_i32_0 : i32
    scf.if %2 {
      %cst = arith.constant 0.000000e+00 : f32
      %11 = vector.broadcast %cst : f32 to vector<4x256xf32>
      %c0_9 = arith.constant 0 : index
      %c0_10 = arith.constant 0 : index
      %12 = vector.load %arg7[%c0_9, %c0_10] : memref<4x256xf32, #tpu.memory_space<vmem>>, vector<4x256xf32>
      tpu.vector_store %arg7[%c0_9, %c0_10], %11 {strides = array<i32>} : memref<4x256xf32, #tpu.memory_space<vmem>>, vector<4x256xf32>,
    } else {
    }
    %c0 = arith.constant 0 : index
    %c0_1 = arith.constant 0 : index
    %c0_2 = arith.constant 0 : index
    %3 = vector.load %arg2[%c0, %c0_1, %c0_2] : memref<1x4x256xf32, #tpu.memory_space<vmem>>, vector<1x4x256xf32>
    %4 = vector.shape_cast %3 : vector<1x4x256xf32> to vector<4x256xf32>
    %c0_3 = arith.constant 0 : index
    %c0_4 = arith.constant 0 : index
    %5 = vector.load %arg7[%c0_3, %c0_4] : memref<4x256xf32, #tpu.memory_space<vmem>>, vector<4x256xf32>
    %6 = arith.addf %5, %4 : vector<4x256xf32>
    %c0_5 = arith.constant 0 : index
    %c0_6 = arith.constant 0 : index
    %7 = vector.load %arg7[%c0_5, %c0_6] : memref<4x256xf32, #tpu.memory_space<vmem>>, vector<4x256xf32>
    tpu.vector_store %arg7[%c0_5, %c0_6], %6 {strides = array<i32>} : memref<4x256xf32, #tpu.memory_space<vmem>>, vector<4x256xf32>,
    %c0_i32_7 = arith.constant 0 : i32
    %8 = arith.cmpi eq, %arg1, %c0_i32_7 : i32
    %9 = arith.extui %8 : i1 to i32
    %c0_i32_8 = arith.constant 0 : i32
    %10 = arith.cmpi ne, %9, %c0_i32_8 : i32
    scf.if %10 {
      %c0_9 = arith.constant 0 : index
      %c0_10 = arith.constant 0 : index
      %11 = vector.load %arg7[%c0_9, %c0_10] : memref<4x256xf32, #tpu.memory_space<vmem>>, vector<4x256xf32>
      %cst = arith.constant dense<0.000000e+00> : vector<4xf32>
      %12 = vector.multi_reduction <add>, %11, %cst [1] : vector<4x256xf32> to vector<4xf32>
      %13 = vector.shape_cast %12 : vector<4xf32> to vector<4x1xf32>
      %cst_11 = arith.constant 3.906250e-03 : f32
      %14 = vector.broadcast %cst_11 : f32 to vector<4x1xf32>
      %15 = arith.mulf %13, %14 : vector<4x1xf32>
      %c0_12 = arith.constant 0 : index
      %c0_13 = arith.constant 0 : index
      %16 = vector.load %arg3[%c0_12, %c0_13] : memref<8x4xf32, #tpu.memory_space<vmem>>, vector<8x4xf32>
      %cst_14 = arith.constant dense<0.000000e+00> : vector<8x1xf32>
      %17 = tpu.matmul %16, %15, %cst_14 {dimension_numbers = #tpu.dot_dimension_numbers<[1], [0], [0], [1], [0, 0, 1, 1], [], []>} : vector<8x4xf32>, vector<4x1xf32>, vector<8x1xf32> -> vector<8x1xf32>
      %c0_15 = arith.constant 0 : index
      %c0_16 = arith.constant 0 : index
      %18 = vector.load %arg4[%c0_15, %c0_16] : memref<8x1xf32, #tpu.memory_space<vmem>>, vector<8x1xf32>
      %19 = arith.mulf %17, %18 : vector<8x1xf32>
      %c0_17 = arith.constant 0 : index
      %c0_18 = arith.constant 0 : index
      %20 = vector.load %arg5[%c0_17, %c0_18] : memref<8x1xf32, #tpu.memory_space<vmem>>, vector<8x1xf32>
      %21 = arith.addf %19, %20 : vector<8x1xf32>
      %cst_19 = arith.constant 0.000000e+00 : f32
      %22 = vector.broadcast %cst_19 : f32 to vector<8x1xf32>
      %23 = arith.maximumf %21, %22 : vector<8x1xf32>
      %24 = vector.shape_cast %23 : vector<8x1xf32> to vector<1x8x1xf32>
      %c0_20 = arith.constant 0 : index
      %c0_21 = arith.constant 0 : index
      %c0_22 = arith.constant 0 : index
      %25 = vector.load %arg6[%c0_20, %c0_21, %c0_22] : memref<1x8x1xf32, #tpu.memory_space<vmem>>, vector<1x8x1xf32>
      tpu.vector_store %arg6[%c0_20, %c0_21, %c0_22], %24 {strides = array<i32>} : memref<1x8x1xf32, #tpu.memory_space<vmem>>, vector<1x8x1xf32>,
    } else {
    }
    return
  }
  func.func @transform_0(%arg0: i32, %arg1: i32) -> (i32, i32, i32) {
    %c0_i32 = arith.constant 0 : i32
    %c0_i32_0 = arith.constant 0 : i32
    return %arg0, %c0_i32, %arg1 : i32, i32, i32
  }
  func.func @transform_1(%arg0: i32, %arg1: i32) -> (i32, i32) {
    %c0_i32 = arith.constant 0 : i32
    %c0_i32_0 = arith.constant 0 : i32
    %c0_i32_1 = arith.constant 0 : i32
    return %c0_i32, %c0_i32_0 : i32, i32
  }
  func.func @transform_2(%arg0: i32, %arg1: i32) -> (i32, i32) {
    %c0_i32 = arith.constant 0 : i32
    %c0_i32_0 = arith.constant 0 : i32
    %c0_i32_1 = arith.constant 0 : i32
    return %c0_i32, %c0_i32_0 : i32, i32
  }
  func.func @transform_3(%arg0: i32, %arg1: i32) -> (i32, i32) {
    %c0_i32 = arith.constant 0 : i32
    %c0_i32_0 = arith.constant 0 : i32
    %c0_i32_1 = arith.constant 0 : i32
    return %c0_i32, %c0_i32_0 : i32, i32
  }
  func.func @transform_4(%arg0: i32, %arg1: i32) -> (i32, i32, i32) {
    %c0_i32 = arith.constant 0 : i32
    %c0_i32_0 = arith.constant 0 : i32
    %c0_i32_1 = arith.constant 0 : i32
    return %arg0, %c0_i32, %c0_i32_0 : i32, i32, i32
  }
}

</mosaic_0001>

<llo_original>
// kernel: tpu_custom_call.1
$region0: #{tpu_custom_call.1}
  #allocation0 [shape = 'u32[]', space=smem, size = 0x4, offset = 0x4, fixed_abs, tag = 'smem constant byte address 0x4 - core index']
  #allocation1 [shape = 'u32[144,128]{1,0:T(1,128)}', space=vmem, size = 0x12000, scoped, tag = 'internal scratch']
  #allocation2 [shape = 'f32[4,256]{1,0:T(4,128)}', space=vmem, size = 0x1000, scoped, tag = 'scratch operand']
  %s0 = inlined_call_operand.vmem [shape: f32[2,4,256], index: 0, kind: input, shape index: {}]
  %s1 = inlined_call_operand.vmem [shape: f32[8,4], index: 1, kind: input, shape index: {}]
  %s2 = inlined_call_operand.vmem [shape: f32[8,1], index: 2, kind: input, shape index: {}]
  %s3 = inlined_call_operand.vmem [shape: f32[8,1], index: 3, kind: input, shape index: {}]
  %s4 = inlined_call_operand.vmem [shape: f32[2,8,1], index: 4, kind: output, shape index: {}]
  %s5 = sld [smem:[#allocation0]]
  $region57: #{tpu_custom_call.1} parent=0
    _
  %s7 = ssub.s32 1, %s5
  %s8 = scalar_select 0, %s7, %s5
  loop: start=0, step=1, limit=4
  $region2: #{tpu_custom_call.1} parent=0 // loop_pre_header
    _
  $region3: #{tpu_custom_call.1} parent=0 // loop_header
    %s10 = sphi 0, %s14
    %p11 = scmp.ge.s32.totalorder %s10, 4
    %s17 = sphi 0, %s29
    %s18 = sphi 0, %s25
    %s19 = sphi 0, %s17
    %s20 = sphi 0, %s18
    %s21 = sphi 0, %s19
    %s22 = sphi 0, %s20
    %s34 = sphi 0, %s36
    %s37 = sphi 0, %s34
    %s38 = sphi 0, %s37
    %s54 = sphi 0, %s38
    %s58 = sphi 0, %s58
    %s60 = sphi 0, %s58
    %s61 = sphi 0, %s60
    %s75 = sphi 0, %s61
    %s79 = sphi 0, %s79
    %s81 = sphi 0, %s79
    %s82 = sphi 0, %s81
    %s96 = sphi 0, %s82
    %s100 = sphi 0, %s100
    %s102 = sphi 0, %s100
    %s103 = sphi 0, %s102
    %s117 = sphi 0, %s103
    %s123 = sphi 0, %s125
    %s126 = sphi 0, %s123
    %s127 = sphi 0, %s126
    %s143 = sphi 0, %s127
  $region4: #{tpu_custom_call.1} parent=0 // loop_header_branch
    %13 = sbr.rel (%p11) target = $region8
  $region5: #{tpu_custom_call.1} parent=0 // loop_body
    %s15 = ssub.s32 %s10, 1
    %s16 = ssub.s32 %s10, 2
    %s23 = sadd.s32 1, %s18
    %p24 = scmp.ge.s32.totalorder %s23, 1
    %s25 = scalar_select %p24, 0, %s23
    %s26 = sadd.s32 1, %s17
    %s27 = scalar_select %p24, %s26, %s17
    %p28 = scmp.ge.s32.totalorder %s27, 2
    %s29 = scalar_select %p28, 0, %s27
    %s30 = ssub.s32 %s17, %s29
    %s31 = ssub.s32 %s18, %s25
    %s32 = sor.u32 %s30, %s31
    %p33 = scmp.eq.s32.totalorder %s32, 0
    %s35 = sadd.s32 %s34, 1
    %s36 = scalar_select %p33, %s34, %s35
    %p39 = pneg %p33
    %p40 = scmp.eq.s32.totalorder %s10, 1
    %p41 = por %p39, %p40
    %p42 = scmp.ne.s32.totalorder %s34, %s37
    %p43 = scmp.eq.s32.totalorder %s10, 0
    %p44 = por %p42, %p43
    %p45 = scmp.ne.s32.totalorder %s34, %s37
    %p46 = scmp.eq.s32.totalorder %s15, 1
    %p47 = por %p45, %p46
    %p48 = scmp.ne.s32.totalorder %s37, %s38
    %p49 = scmp.eq.s32.totalorder %s15, 0
    %p50 = por %p48, %p49
    %p51 = scmp.ne.s32.totalorder %s37, %s38
    %p52 = scmp.eq.s32.totalorder %s16, 1
    %p53 = por %p51, %p52
    %p55 = scmp.ne.s32.totalorder %s38, %s54
    %p56 = scmp.eq.s32.totalorder %s16, 0
    %p57 = por %p55, %p56
    %s59 = sadd.s32 %s58, 1
    %p62 = scmp.eq.s32.totalorder %s10, 1
    %p63 = scmp.ne.s32.totalorder %s58, %s60
    %p64 = scmp.eq.s32.totalorder %s10, 0
    %p65 = por %p63, %p64
    %p66 = scmp.ne.s32.totalorder %s58, %s60
    %p67 = scmp.eq.s32.totalorder %s15, 1
    %p68 = por %p66, %p67
    %p69 = scmp.ne.s32.totalorder %s60, %s61
    %p70 = scmp.eq.s32.totalorder %s15, 0
    %p71 = por %p69, %p70
    %p72 = scmp.ne.s32.totalorder %s60, %s61
    %p73 = scmp.eq.s32.totalorder %s16, 1
    %p74 = por %p72, %p73
    %p76 = scmp.ne.s32.totalorder %s61, %s75
    %p77 = scmp.eq.s32.totalorder %s16, 0
    %p78 = por %p76, %p77
    %s80 = sadd.s32 %s79, 1
    %p83 = scmp.eq.s32.totalorder %s10, 1
    %p84 = scmp.ne.s32.totalorder %s79, %s81
    %p85 = scmp.eq.s32.totalorder %s10, 0
    %p86 = por %p84, %p85
    %p87 = scmp.ne.s32.totalorder %s79, %s81
    %p88 = scmp.eq.s32.totalorder %s15, 1
    %p89 = por %p87, %p88
    %p90 = scmp.ne.s32.totalorder %s81, %s82
    %p91 = scmp.eq.s32.totalorder %s15, 0
    %p92 = por %p90, %p91
    %p93 = scmp.ne.s32.totalorder %s81, %s82
    %p94 = scmp.eq.s32.totalorder %s16, 1
    %p95 = por %p93, %p94
    %p97 = scmp.ne.s32.totalorder %s82, %s96
    %p98 = scmp.eq.s32.totalorder %s16, 0
    %p99 = por %p97, %p98
    %s101 = sadd.s32 %s100, 1
    %p104 = scmp.eq.s32.totalorder %s10, 1
    %p105 = scmp.ne.s32.totalorder %s100, %s102
    %p106 = scmp.eq.s32.totalorder %s10, 0
    %p107 = por %p105, %p106
    %p108 = scmp.ne.s32.totalorder %s100, %s102
    %p109 = scmp.eq.s32.totalorder %s15, 1
    %p110 = por %p108, %p109
    %p111 = scmp.ne.s32.totalorder %s102, %s103
    %p112 = scmp.eq.s32.totalorder %s15, 0
    %p113 = por %p111, %p112
    %p114 = scmp.ne.s32.totalorder %s102, %s103
    %p115 = scmp.eq.s32.totalorder %s16, 1
    %p116 = por %p114, %p115
    %p118 = scmp.ne.s32.totalorder %s103, %s117
    %p119 = scmp.eq.s32.totalorder %s16, 0
    %p120 = por %p118, %p119
    %s121 = ssub.s32 %s17, %s29
    %p122 = scmp.eq.s32.totalorder %s121, 0
    %s124 = sadd.s32 %s123, 1
    %s125 = scalar_select %p122, %s123, %s124
    %p128 = pneg %p122
    %p129 = scmp.eq.s32.totalorder %s10, 1
    %p130 = por %p128, %p129
    %p131 = scmp.ne.s32.totalorder %s123, %s126
    %p132 = scmp.eq.s32.totalorder %s10, 0
    %p133 = por %p131, %p132
    %p134 = scmp.ne.s32.totalorder %s123, %s126
    %p135 = scmp.eq.s32.totalorder %s15, 1
    %p136 = por %p134, %p135
    %p137 = scmp.ne.s32.totalorder %s126, %s127
    %p138 = scmp.eq.s32.totalorder %s15, 0
    %p139 = por %p137, %p138
    %p140 = scmp.ne.s32.totalorder %s126, %s127
    %p141 = scmp.eq.s32.totalorder %s16, 1
    %p142 = por %p140, %p141
    %p144 = scmp.ne.s32.totalorder %s127, %s143
    %p145 = scmp.eq.s32.totalorder %s16, 0
    %p146 = por %p144, %p145
    %p147 = scmp.le.s32.totalorder 1, %s10
    %p148 = scmp.lt.s32.totalorder %s10, 3
    %p149 = pnand %p147, %p148
    %p150 = pneg %p149
    // Predicated region
    $region9: #{tpu_custom_call.1} parent=5 // pred_check
      _
    $region10: #{tpu_custom_call.1} parent=5 // pred_check_branch
      %152 = sbr.rel (%p149) target = $region12
    $region11: #{tpu_custom_call.1} parent=5 // pred_region
      %s153 = ssub.s32 %s10, 1
      // Predicated region
      $region13: #{tpu_custom_call.1} parent=11 // pred_check
        %p154 = pneg %p71
      $region14: #{tpu_custom_call.1} parent=11 // pred_check_branch
        %156 = sbr.rel (%p154) target = $region16
      $region15: #{tpu_custom_call.1} parent=11 // pred_region
        _
      $region16: #{tpu_custom_call.1} parent=11 // pred_fallthru
        _
      // Predicated region
      $region17: #{tpu_custom_call.1} parent=11 // pred_check
        %p157 = pneg %p92
      $region18: #{tpu_custom_call.1} parent=11 // pred_check_branch
        %159 = sbr.rel (%p157) target = $region20
      $region19: #{tpu_custom_call.1} parent=11 // pred_region
        _
      $region20: #{tpu_custom_call.1} parent=11 // pred_fallthru
        _
      // Predicated region
      $region21: #{tpu_custom_call.1} parent=11 // pred_check
        %p160 = pneg %p113
      $region22: #{tpu_custom_call.1} parent=11 // pred_check_branch
        %162 = sbr.rel (%p160) target = $region24
      $region23: #{tpu_custom_call.1} parent=11 // pred_region
        _
      $region24: #{tpu_custom_call.1} parent=11 // pred_fallthru
        _
    $region12: #{tpu_custom_call.1} parent=5 // pred_fallthru
      _
    %p163 = scmp.lt.s32.totalorder %s10, 2
    // Predicated region
    $region25: #{tpu_custom_call.1} parent=5 // pred_check
      %p164 = pneg %p163
    $region26: #{tpu_custom_call.1} parent=5 // pred_check_branch
      %166 = sbr.rel (%p164) target = $region28
    $region27: #{tpu_custom_call.1} parent=5 // pred_region
      // Predicated region
      $region29: #{tpu_custom_call.1} parent=27 // pred_check
        %p167 = pneg %p44
      $region30: #{tpu_custom_call.1} parent=27 // pred_check_branch
        %169 = sbr.rel (%p167) target = $region32
      $region31: #{tpu_custom_call.1} parent=27 // pred_region
        %s170 = smul.u32 2, %s18
        %p171 = scmp.lt.s32.totalorder %s17, 1
        %s172 = scalar_select %p171, %s17, 1
        %p173 = scmp.lt.s32.totalorder %s170, 1
        %s174 = scalar_select %p173, %s170, 1
        %s175 = smul.addr %s172, 2
        %s176 = sadd.s32 %s174, %s175
        %s177 = smul.addr %s176, 4
        %s178 = scalar_lea.vmem %s0, %s177
        %s179 = smul.u32 2, %s18
      $region32: #{tpu_custom_call.1} parent=27 // pred_fallthru
        _
    $region28: #{tpu_custom_call.1} parent=5 // pred_fallthru
      _
    %p180 = scmp.le.s32.totalorder 1, %s10
    %p181 = scmp.lt.s32.totalorder %s10, 3
    %p182 = pnand %p180, %p181
    %p183 = pneg %p182
    // Predicated region
    $region33: #{tpu_custom_call.1} parent=5 // pred_check
      _
    $region34: #{tpu_custom_call.1} parent=5 // pred_check_branch
      %185 = sbr.rel (%p182) target = $region36
    $region35: #{tpu_custom_call.1} parent=5 // pred_region
      %s186 = ssub.s32 %s10, 1
      %s187 = smul.u32 2, %s20
      %p188 = scmp.lt.s32.totalorder %s19, 1
      %s189 = scalar_select %p188, %s19, 1
      %p190 = scmp.lt.s32.totalorder %s187, 1
      %s191 = scalar_select %p190, %s187, 1
      %s192 = smul.addr %s189, 2
      %s193 = sadd.s32 %s191, %s192
      %s194 = smul.addr %s193, 4
      %s195 = scalar_lea.vmem %s0, %s194
      %p196 = pneg %p50
      %p197 = pneg %p47
      %p198 = pneg %p71
      %p199 = pneg %p68
      %p200 = pneg %p92
      %p201 = pneg %p89
      %p202 = pneg %p113
      %p203 = pneg %p110
      %p204 = pneg %p139
      %p205 = pneg %p136
      %p206 = scmp.lt.s32.totalorder %s19, 1
      %s207 = scalar_select %p206, %s19, 1
      %s208 = smul.addr %s207, 8
      %s209 = scalar_lea.vmem %s4, %s208
      %s210 = smul.u32 2, %s20
      %p211 = scmp.lt.s32.totalorder %s19, 1
      %s212 = scalar_select %p211, %s19, 1
      %p213 = scmp.lt.s32.totalorder %s210, 1
      %s214 = scalar_select %p213, %s210, 1
      %s215 = smul.addr %s212, 2
      %s216 = sadd.s32 %s214, %s215
      %s217 = smul.addr %s216, 4
      %s218 = scalar_lea.vmem %s0, %s217
      %s219 = smul.u32 2, %s20
      %p220 = scmp.lt.s32.totalorder %s19, 1
      %s221 = scalar_select %p220, %s19, 1
      %s222 = smul.addr %s221, 8
      %s223 = scalar_lea.vmem %s4, %s222
      %p224 = scmp.eq.s32.totalorder %s20, 0
      // Predicated region
      $region37: #{tpu_custom_call.1} parent=35 // pred_check
        %p225 = pneg %p224
      $region38: #{tpu_custom_call.1} parent=35 // pred_check_branch
        %227 = sbr.rel (%p225) target = $region40
      $region39: #{tpu_custom_call.1} parent=35 // pred_region
        %228 = vst [vmem:[#allocation2] sm:$0xff] 0.0
      $region40: #{tpu_custom_call.1} parent=35 // pred_fallthru
        _
      %v229 = vld [vmem:[%s218] sm:$0xff]
      %v230 = vld [vmem:[#allocation2] sm:$0xff]
      %v231 = vadd.f32 %v230, %v229
      %232 = vst [vmem:[#allocation2] sm:$0xff] %v231
      // Predicated region
      $region41: #{tpu_custom_call.1} parent=35 // pred_check
        %p233 = pneg %p224
      $region42: #{tpu_custom_call.1} parent=35 // pred_check_branch
        %235 = sbr.rel (%p233) target = $region44
      $region43: #{tpu_custom_call.1} parent=35 // pred_region
        %v236 = vld [vmem:[#allocation2] sm:$0xff]
        %v238 = vcombine.high %v236, %v236
        %vm240 = vcmask 1043456
        %v241 = vsel %vm240, %v236, 0.0
        %v242 = vsel %vm240, %v238, 0.0
        %v243 = vadd.f32 %v241, %v242
        %244 = vadd.xlane.f32.xlu0 %v243
        %v245 = vpop.xlane.xlu0 %244
        %v246 = vmul.f32 %v245, 0.00390625
        %v247 = vld [vmem:[%s1] sm:$0xff]
        %vm248 = vcmask 31744
        %v250 = vsel %vm248, %v247, 0
        %v253 = vsel %vm240, %v246, 0
        %255 = vmatprep.subr.mxu0 0.0
        %256 = vmatpush1.msra.mxu0 %v253
        %257 = vmatprep.subr.mxu0 0.0
        %258 = vmatpush1.msra.mxu0 0.0
        %259 = vmatprep.subr.mxu0 0.0
        %260 = vmatpush1.msra.mxu0 0.0
        %261 = vmatprep.subr.mxu0 0.0
        %262 = vmatpush1.msra.mxu0 0.0
        %263 = vmatprep.subr.mxu0 0.0
        %264 = vmatpush1.msra.mxu0 0.0
        %265 = vmatprep.subr.mxu0 0.0
        %266 = vmatpush1.msra.mxu0 0.0
        %267 = vmatprep.subr.mxu0 0.0
        %268 = vmatpush1.msra.mxu0 0.0
        %269 = vmatprep.subr.mxu0 0.0
        %270 = vmatpush1.msra.mxu0 0.0
        %271 = vmatprep.subr.mxu0 0.0
        %272 = vmatpush1.msra.mxu0 0.0
        %273 = vmatprep.subr.mxu0 0.0
        %274 = vmatpush1.msra.mxu0 0.0
        %275 = vmatprep.subr.mxu0 0.0
        %276 = vmatpush1.msra.mxu0 0.0
        %277 = vmatprep.subr.mxu0 0.0
        %278 = vmatpush1.msra.mxu0 0.0
        %279 = vmatprep.subr.mxu0 0.0
        %280 = vmatpush1.msra.mxu0 0.0
        %281 = vmatprep.subr.mxu0 0.0
        %282 = vmatpush1.msra.mxu0 0.0
        %283 = vmatprep.subr.mxu0 0.0
        %284 = vmatpush1.msra.mxu0 0.0
        %285 = vmatprep.subr.mxu0 0.0
        %286 = vmatpush1.msra.mxu0 0.0
        %287 = vmatprep.subr.mxu0 0.0
        %288 = vmatpush1.msra.mxu0 0.0
        %289 = vmatprep.subr.mxu0 0.0
        %290 = vmatpush1.msra.mxu0 0.0
        %291 = vmatprep.subr.mxu0 0.0
        %292 = vmatpush1.msra.mxu0 0.0
        %293 = vmatprep.subr.mxu0 0.0
        %294 = vmatpush1.msra.mxu0 0.0
        %295 = vmatprep.subr.mxu0 0.0
        %296 = vmatpush1.msra.mxu0 0.0
        %297 = vmatprep.subr.mxu0 0.0
        %298 = vmatpush1.msra.mxu0 0.0
        %299 = vmatprep.subr.mxu0 0.0
        %300 = vmatpush1.msra.mxu0 0.0
        %301 = vmatprep.subr.mxu0 0.0
        %302 = vmatpush1.msra.mxu0 0.0
        %303 = vmatprep.subr.mxu0 0.0
        %304 = vmatpush1.msra.mxu0 0.0
        %305 = vmatprep.subr.mxu0 0.0
        %306 = vmatpush1.msra.mxu0 0.0
        %307 = vmatprep.subr.mxu0 0.0
        %308 = vmatpush1.msra.mxu0 0.0
        %309 = vmatprep.subr.mxu0 0.0
        %310 = vmatpush1.msra.mxu0 0.0
        %311 = vmatprep.subr.mxu0 0.0
        %312 = vmatpush1.msra.mxu0 0.0
        %313 = vmatprep.subr.mxu0 0.0
        %314 = vmatpush1.msra.mxu0 0.0
        %315 = vmatprep.subr.mxu0 0.0
        %316 = vmatpush1.msra.mxu0 0.0
        %317 = vmatprep.subr.mxu0 0.0
        %318 = vmatpush1.msra.mxu0 0.0
        %319 = vmatprep.mubr.f32.mxu0 0.0
        %320 = vmatmul.mubr.f32.gmra.mrb[0].mxu0 %v250
        %v321 = vpop.f32.mrb[0].mxu0
        %v322 = vadd.f32 0.0, %v321
        %v323 = vpop.f32.mrb[0].mxu0
        %324 = vdwg.mxu0
        %v325 = vld [vmem:[%s2] sm:$0xff]
        %v326 = vmul.f32 %v322, %v325
        %v327 = vld [vmem:[%s3] sm:$0xff]
        %v328 = vadd.f32 %v326, %v327
        %v329 = vmax.f32 %v328, 0.0
        %vm330 = vcmask 7168
        %331 = vst.msk [vmem:[%s223] sm:$0xff] %vm330, %v329
      $region44: #{tpu_custom_call.1} parent=35 // pred_fallthru
        _
      %p332 = scmp.lt.s32.totalorder %s19, 1
      %s333 = scalar_select %p332, %s19, 1
      %s334 = smul.addr %s333, 8
      %s335 = scalar_lea.vmem %s4, %s334
      // Predicated region
      $region45: #{tpu_custom_call.1} parent=35 // pred_check
        %p336 = pneg %p136
      $region46: #{tpu_custom_call.1} parent=35 // pred_check_branch
        %338 = sbr.rel (%p336) target = $region48
      $region47: #{tpu_custom_call.1} parent=35 // pred_region
        _
      $region48: #{tpu_custom_call.1} parent=35 // pred_fallthru
        _
    $region36: #{tpu_custom_call.1} parent=5 // pred_fallthru
      _
    %p339 = scmp.le.s32.totalorder 2, %s10
    // Predicated region
    $region49: #{tpu_custom_call.1} parent=5 // pred_check
      %p340 = pneg %p339
    $region50: #{tpu_custom_call.1} parent=5 // pred_check_branch
      %342 = sbr.rel (%p340) target = $region52
    $region51: #{tpu_custom_call.1} parent=5 // pred_region
      %s343 = ssub.s32 %s10, 2
      // Predicated region
      $region53: #{tpu_custom_call.1} parent=51 // pred_check
        %p344 = pneg %p142
      $region54: #{tpu_custom_call.1} parent=51 // pred_check_branch
        %346 = sbr.rel (%p344) target = $region56
      $region55: #{tpu_custom_call.1} parent=51 // pred_region
        %p347 = scmp.lt.s32.totalorder %s21, 1
        %s348 = scalar_select %p347, %s21, 1
        %s349 = smul.addr %s348, 8
        %s350 = scalar_lea.vmem %s4, %s349
      $region56: #{tpu_custom_call.1} parent=51 // pred_fallthru
        _
    $region52: #{tpu_custom_call.1} parent=5 // pred_fallthru
      _
  $region6: #{tpu_custom_call.1} parent=0 // loop_footer
    %s14 = sadd.s32 1, %s10
  $region7: #{tpu_custom_call.1} parent=0 // loop_footer_branch
    %9 = sbr.rel target = $region3
  $region8: #{tpu_custom_call.1} parent=0 // loop_exit
    _

</llo_original>
